<compile_context>
chip_gen: v5e
topology: v5e:2x2
jax: 0.10.0
libtpu: 0.0.40
codegen_flags: <defaults>
</compile_context>

<pallas_src>
import functools
import random

import jax
import jax.numpy as jnp
from jax import lax
from jax.experimental import pallas as pl
from jax.experimental.pallas import tpu as pltpu

LANE = 128          # lane width (last dim)
SUBLANE_BF16 = 16   # bf16 sublane packing (second-to-last dim)
MAX_TILE_N = 1024   # row-tile cap (review: 512-1024 reaches ~85% HBM roofline)


def _round_up(n, m):
    return ((n + m - 1) // m) * m


def dynamicnet_kernel(n_repeat, x_ref, w1_ref, b1_ref, w2_ref, b2_ref,
                      w3_ref, b3_ref, o_ref):
    """One row-tile of DynamicNet. `n_repeat` is a Python int (0..3) closed
    over at trace time, so the middle-layer reuse is statically unrolled."""
    # input_linear + ReLU (clamp(min=0)); bf16 operands, f32 accumulate.
    h = jnp.dot(x_ref[...], w1_ref[...], preferred_element_type=jnp.float32)
    h = jnp.maximum(h + b1_ref[...], 0.0)

    # middle_linear reused n_repeat times, statically unrolled.
    if n_repeat > 0:
        w2 = w2_ref[...]                                   # loaded once
        b2b = jnp.broadcast_to(b2_ref[...], h.shape)       # hoisted broadcast
        for _ in range(n_repeat):
            m = jnp.dot(h.astype(jnp.bfloat16), w2,
                        preferred_element_type=jnp.float32)
            h = jnp.maximum(m + b2b, 0.0)

    # output_linear (no activation); lane-dense 128-wide bf16 store
    # (halves the dominant HBM write stream; upcast happens outside).
    y = jnp.dot(h.astype(jnp.bfloat16), w3_ref[...],
                preferred_element_type=jnp.float32)
    o_ref[...] = (y + b3_ref[...]).astype(o_ref.dtype)


def _pick_tile(n_rows):
    """Row tiling: bf16-friendly (multiple of 16), up to 1024 rows per step,
    and >=2 grid steps whenever the batch spans more than one tile so the
    v7x dual TensorCore can split the `parallel` axis."""
    n16 = _round_up(max(int(n_rows), 1), SUBLANE_BF16)
    if n16 <= SUBLANE_BF16:
        tile_n = n16
    else:
        half = _round_up(-(-n16 // 2), SUBLANE_BF16)   # ceil(n16/2) rounded up
        tile_n = min(MAX_TILE_N, half)
    n_pad = _round_up(n16, tile_n)
    return tile_n, n_pad


def make_dynamic_net(params):
    """Pads/casts the weights ONCE (not per forward) and returns a jitted
    forward(x, n_repeat) with n_repeat static (unrolled per variant)."""
    D_in, H = params["w1"].shape
    D_out = params["w3"].shape[1]

    D_in_p = _round_up(D_in, LANE)
    H_p = _round_up(H, LANE)
    D_out_p = _round_up(D_out, LANE)

    def pad_w(w, rows, cols):
        out = jnp.zeros((rows, cols), jnp.bfloat16)
        return out.at[:w.shape[0], :w.shape[1]].set(w.astype(jnp.bfloat16))

    def pad_b(b, cols):
        out = jnp.zeros((1, cols), jnp.float32)
        return out.at[:, :b.shape[1]].set(b.astype(jnp.float32))

    # Padded, bf16-cast weights cached on device for the lifetime of the net.
    w1 = pad_w(params["w1"], D_in_p, H_p)
    b1 = pad_b(params["b1"], H_p)
    w2 = pad_w(params["w2"], H_p, H_p)
    b2 = pad_b(params["b2"], H_p)
    w3 = pad_w(params["w3"], H_p, D_out_p)
    b3 = pad_b(params["b3"], D_out_p)

    @functools.partial(jax.jit, static_argnums=(1,))
    def forward(x, n_repeat):
        N = x.shape[0]
        tile_n, N_pad = _pick_tile(N)
        grid = (N_pad // tile_n,)

        # Pad the batch to lane-dense bf16 (fused into this jit).
        xp = jnp.zeros((N_pad, D_in_p), jnp.bfloat16)
        xp = xp.at[:N, :D_in].set(x.astype(jnp.bfloat16))

        flops = 2 * N_pad * (D_in_p * H_p + n_repeat * H_p * H_p
                             + H_p * D_out_p)
        bytes_accessed = (xp.size * 2
                          + (w1.size + w2.size + w3.size) * 2
                          + (b1.size + b2.size + b3.size) * 4
                          + N_pad * D_out_p * 2)          # bf16 output

        kernel = functools.partial(dynamicnet_kernel, int(n_repeat))

        y_pad = pl.pallas_call(
            kernel,
            out_shape=jax.ShapeDtypeStruct((N_pad, D_out_p), jnp.bfloat16),
            grid=grid,
            in_specs=[
                pl.BlockSpec((tile_n, D_in_p), lambda i: (i, 0)),  # x tiled
                pl.BlockSpec((D_in_p, H_p),    lambda i: (0, 0)),  # w1 resident
                pl.BlockSpec((1, H_p),         lambda i: (0, 0)),  # b1
                pl.BlockSpec((H_p, H_p),       lambda i: (0, 0)),  # w2
                pl.BlockSpec((1, H_p),         lambda i: (0, 0)),  # b2
                pl.BlockSpec((H_p, D_out_p),   lambda i: (0, 0)),  # w3
                pl.BlockSpec((1, D_out_p),     lambda i: (0, 0)),  # b3
            ],
            out_specs=pl.BlockSpec((tile_n, D_out_p), lambda i: (i, 0)),
            compiler_params=pltpu.CompilerParams(
                dimension_semantics=("parallel",),
                vmem_limit_bytes=32 * 1024 * 1024,
            ),
            cost_estimate=pl.CostEstimate(
                flops=flops, transcendentals=0,
                bytes_accessed=bytes_accessed),
        )(xp, w1, b1, w2, b2, w3, b3)

        # Strip padding and upcast the bf16 store back to f32 for the caller.
        return y_pad[:N, :D_out].astype(jnp.float32)

    return forward


def init_params(key, d_in, h, d_out):
    """Deterministic init matching the PyTorch Linear shapes (stored transposed)."""
    ks = jax.random.split(key, 6)

    def lin(kw, kb, fan_in, fan_out):
        bound = 1.0 / jnp.sqrt(fan_in)
        w = jax.random.uniform(kw, (fan_in, fan_out), jnp.float32, -bound, bound)
        b = jax.random.uniform(kb, (1, fan_out), jnp.float32, -bound, bound)
        return w, b

    w1, b1 = lin(ks[0], ks[1], d_in, h)
    w2, b2 = lin(ks[2], ks[3], h, h)
    w3, b3 = lin(ks[4], ks[5], h, d_out)
    return dict(w1=w1, b1=b1, w2=w2, b2=b2, w3=w3, b3=b3)


def reference_forward(x, params, n_repeat):
    """Pure-JAX reference emulating the kernel numerics: bf16 matmul operands,
    f32 accumulation / bias / ReLU, final result stored in bf16."""
    def r(a):
        return a.astype(jnp.bfloat16).astype(jnp.float32)

    def mm(a, w):
        return jnp.dot(r(a), r(w), preferred_element_type=jnp.float32,
                       precision=lax.Precision.HIGHEST)

    h = jnp.maximum(mm(x, params["w1"]) + params["b1"], 0.0)
    for _ in range(n_repeat):
        h = jnp.maximum(mm(h, params["w2"]) + params["b2"], 0.0)
    y = mm(h, params["w3"]) + params["b3"]
    return y.astype(jnp.bfloat16).astype(jnp.float32)   # emulate bf16 store


if __name__ == "__main__":
    N, D_in, H, D_out = 8, 32, 64, 16

    key = jax.random.PRNGKey(0)
    kx, kp = jax.random.split(key)
    x = jax.random.normal(kx, (N, D_in), dtype=jnp.float32)
    params = init_params(kp, D_in, H, D_out)

    forward = make_dynamic_net(params)   # pads/casts weights once

    # Validate every possible repeat count (the dynamic control flow has only
    # 4 variants, each traced/unrolled statically).
    for k in range(4):
        y = jax.block_until_ready(forward(x, k))
        y_ref = reference_forward(x, params, k)
        assert y.shape == (N, D_out)
        # Tolerance covers the (documented) bf16 output store.
        assert jnp.allclose(y, y_ref, atol=2e-2, rtol=2e-2), \
            f"mismatch at n_repeat={k}"

    # Deterministic stand-in for the per-forward random.randint(0, 3).
    # TODO(synk): torch's per-forward random.randint is host-side control flow;
    # it is taken as a static Python int here and unrolled at trace time.
    random.seed(0)
    n_repeat = random.randint(0, 3)
    y = jax.block_until_ready(forward(x, n_repeat))
    assert y.shape == (N, D_out)

    print("KERNEL_OK")
</pallas_src>

<mosaic_0001>
module attributes {stable_mosaic.version = 11 : i64} {
  func.func @dynamicnet_kernel(%arg0: i32, %arg1: memref<16x128xbf16, #tpu.memory_space<vmem>>, %arg2: memref<128x128xbf16, #tpu.memory_space<vmem>>, %arg3: memref<1x128xf32, #tpu.memory_space<vmem>>, %arg4: memref<128x128xbf16, #tpu.memory_space<vmem>>, %arg5: memref<1x128xf32, #tpu.memory_space<vmem>>, %arg6: memref<128x128xbf16, #tpu.memory_space<vmem>>, %arg7: memref<1x128xf32, #tpu.memory_space<vmem>>, %arg8: memref<16x128xbf16, #tpu.memory_space<vmem>>) attributes {dimension_semantics = [#tpu.dimension_semantics<parallel>], iteration_bounds = array<i64: 1>, scalar_prefetch = 0 : i64, scratch_operands = 0 : i64, tpu.core_type = #tpu.core_type<tc>, window_params = [{transform_indices = @transform_0, window_bounds = array<i64: 16, 128>}, {pipeline_mode = #tpu.pipeline_mode<synchronous>, transform_indices = @transform_1, window_bounds = array<i64: 128, 128>}, {pipeline_mode = #tpu.pipeline_mode<synchronous>, transform_indices = @transform_2, window_bounds = array<i64: 1, 128>}, {pipeline_mode = #tpu.pipeline_mode<synchronous>, transform_indices = @transform_3, window_bounds = array<i64: 128, 128>}, {pipeline_mode = #tpu.pipeline_mode<synchronous>, transform_indices = @transform_4, window_bounds = array<i64: 1, 128>}, {pipeline_mode = #tpu.pipeline_mode<synchronous>, transform_indices = @transform_5, window_bounds = array<i64: 128, 128>}, {pipeline_mode = #tpu.pipeline_mode<synchronous>, transform_indices = @transform_6, window_bounds = array<i64: 1, 128>}, {transform_indices = @transform_7, window_bounds = array<i64: 16, 128>}]} {
    %c0 = arith.constant 0 : index
    %c0_0 = arith.constant 0 : index
    %0 = vector.load %arg1[%c0, %c0_0] : memref<16x128xbf16, #tpu.memory_space<vmem>>, vector<16x128xbf16>
    %c0_1 = arith.constant 0 : index
    %c0_2 = arith.constant 0 : index
    %1 = vector.load %arg2[%c0_1, %c0_2] : memref<128x128xbf16, #tpu.memory_space<vmem>>, vector<128x128xbf16>
    %cst = arith.constant dense<0.000000e+00> : vector<16x128xf32>
    %2 = tpu.matmul %0, %1, %cst {dimension_numbers = #tpu.dot_dimension_numbers<[1], [0], [0], [1], [0, 0, 1, 1], [], []>} : vector<16x128xbf16>, vector<128x128xbf16>, vector<16x128xf32> -> vector<16x128xf32>
    %c0_3 = arith.constant 0 : index
    %c0_4 = arith.constant 0 : index
    %3 = vector.load %arg3[%c0_3, %c0_4] : memref<1x128xf32, #tpu.memory_space<vmem>>, vector<1x128xf32>
    %4 = vector.broadcast %3 : vector<1x128xf32> to vector<16x128xf32>
    %5 = arith.addf %2, %4 : vector<16x128xf32>
    %cst_5 = arith.constant 0.000000e+00 : f32
    %6 = vector.broadcast %cst_5 : f32 to vector<16x128xf32>
    %7 = arith.maximumf %5, %6 : vector<16x128xf32>
    %8 = arith.truncf %7 : vector<16x128xf32> to vector<16x128xbf16>
    %c0_6 = arith.constant 0 : index
    %c0_7 = arith.constant 0 : index
    %9 = vector.load %arg6[%c0_6, %c0_7] : memref<128x128xbf16, #tpu.memory_space<vmem>>, vector<128x128xbf16>
    %cst_8 = arith.constant dense<0.000000e+00> : vector<16x128xf32>
    %10 = tpu.matmul %8, %9, %cst_8 {dimension_numbers = #tpu.dot_dimension_numbers<[1], [0], [0], [1], [0, 0, 1, 1], [], []>} : vector<16x128xbf16>, vector<128x128xbf16>, vector<16x128xf32> -> vector<16x128xf32>
    %c0_9 = arith.constant 0 : index
    %c0_10 = arith.constant 0 : index
    %11 = vector.load %arg7[%c0_9, %c0_10] : memref<1x128xf32, #tpu.memory_space<vmem>>, vector<1x128xf32>
    %12 = vector.broadcast %11 : vector<1x128xf32> to vector<16x128xf32>
    %13 = arith.addf %10, %12 : vector<16x128xf32>
    %14 = arith.truncf %13 : vector<16x128xf32> to vector<16x128xbf16>
    %c0_11 = arith.constant 0 : index
    %c0_12 = arith.constant 0 : index
    %15 = vector.load %arg8[%c0_11, %c0_12] : memref<16x128xbf16, #tpu.memory_space<vmem>>, vector<16x128xbf16>
    tpu.vector_store %arg8[%c0_11, %c0_12], %14 {strides = array<i32>} : memref<16x128xbf16, #tpu.memory_space<vmem>>, vector<16x128xbf16>,
    return
  }
  func.func @transform_0(%arg0: i32) -> (i32, i32) {
    %c0_i32 = arith.constant 0 : i32
    %c0_i32_0 = arith.constant 0 : i32
    return %arg0, %c0_i32 : i32, i32
  }
  func.func @transform_1(%arg0: i32) -> (i32, i32) {
    %c0_i32 = arith.constant 0 : i32
    %c0_i32_0 = arith.constant 0 : i32
    %c0_i32_1 = arith.constant 0 : i32
    return %c0_i32, %c0_i32_0 : i32, i32
  }
  func.func @transform_2(%arg0: i32) -> (i32, i32) {
    %c0_i32 = arith.constant 0 : i32
    %c0_i32_0 = arith.constant 0 : i32
    %c0_i32_1 = arith.constant 0 : i32
    return %c0_i32, %c0_i32_0 : i32, i32
  }
  func.func @transform_3(%arg0: i32) -> (i32, i32) {
    %c0_i32 = arith.constant 0 : i32
    %c0_i32_0 = arith.constant 0 : i32
    %c0_i32_1 = arith.constant 0 : i32
    return %c0_i32, %c0_i32_0 : i32, i32
  }
  func.func @transform_4(%arg0: i32) -> (i32, i32) {
    %c0_i32 = arith.constant 0 : i32
    %c0_i32_0 = arith.constant 0 : i32
    %c0_i32_1 = arith.constant 0 : i32
    return %c0_i32, %c0_i32_0 : i32, i32
  }
  func.func @transform_5(%arg0: i32) -> (i32, i32) {
    %c0_i32 = arith.constant 0 : i32
    %c0_i32_0 = arith.constant 0 : i32
    %c0_i32_1 = arith.constant 0 : i32
    return %c0_i32, %c0_i32_0 : i32, i32
  }
  func.func @transform_6(%arg0: i32) -> (i32, i32) {
    %c0_i32 = arith.constant 0 : i32
    %c0_i32_0 = arith.constant 0 : i32
    %c0_i32_1 = arith.constant 0 : i32
    return %c0_i32, %c0_i32_0 : i32, i32
  }
  func.func @transform_7(%arg0: i32) -> (i32, i32) {
    %c0_i32 = arith.constant 0 : i32
    %c0_i32_0 = arith.constant 0 : i32
    return %arg0, %c0_i32 : i32, i32
  }
}

</mosaic_0001>

<llo_original>
// kernel: forward.1
$region0: #{forward.1}
  #allocation0 [shape = 'u32[]', space=smem, size = 0x4, offset = 0x4, fixed_abs, tag = 'smem constant byte address 0x4 - core index']
  #allocation1 [shape = 'u32[72,128]{1,0:T(1,128)}', space=vmem, size = 0x9000, scoped, tag = 'internal scratch']
  %s0 = inlined_call_operand.vmem [shape: bf16[16,128], index: 0, kind: input, shape index: {}]
  %s1 = inlined_call_operand.hbm [shape: bf16[128,128], index: 1, kind: input, shape index: {}]
  %s2 = inlined_call_operand.vmem [shape: f32[1,128], index: 2, kind: input, shape index: {}]
  %s3 = inlined_call_operand.hbm [shape: bf16[128,128], index: 3, kind: input, shape index: {}]
  %s4 = inlined_call_operand.vmem [shape: f32[1,128], index: 4, kind: input, shape index: {}]
  %s5 = inlined_call_operand.hbm [shape: bf16[128,128], index: 5, kind: input, shape index: {}]
  %s6 = inlined_call_operand.vmem [shape: f32[1,128], index: 6, kind: input, shape index: {}]
  %s7 = inlined_call_operand.vmem [shape: bf16[16,128], index: 7, kind: output, shape index: {}]
  %s8 = sld [smem:[#allocation0]]
  $region50: #{forward.1} parent=0
    _
  %s10 = ssub.s32 1, %s8
  %s11 = scalar_select 0, %s10, %s8
  $region1: #{forward.1} parent=0
    #allocation2 [shape = 'u8[32768]{0}', space=vmem, size = 0x8000, scoped, tag = 'input window, operand 1, single buffered']
    #allocation3 [shape = 's32[1]{0}', space=sflag, size = 0x4, scoped, tag = 'scoped memory for forward.1']
    #allocation4 [shape = 'u8[32768]{0}', space=vmem, size = 0x8000, scoped, tag = 'input window, operand 3, single buffered']
    #allocation5 [shape = 's32[1]{0}', space=sflag, size = 0x4, scoped, tag = 'scoped memory for forward.1']
    #allocation6 [shape = 'u8[32768]{0}', space=vmem, size = 0x8000, scoped, tag = 'input window, operand 5, single buffered']
    %12 = vsyncpa [#allocation3], 0
    %13 = vsyncpa [#allocation5], 0
    // Predicated region
    $region2: #{forward.1} parent=1 // pred_check
      _
    $region3: #{forward.1} parent=1 // pred_check_branch
      %15 = sbr.rel (0) target = $region5
    $region4: #{forward.1} parent=1 // pred_region
      _
    $region5: #{forward.1} parent=1 // pred_fallthru
      _
    // Predicated region
    $region6: #{forward.1} parent=1 // pred_check
      _
    $region7: #{forward.1} parent=1 // pred_check_branch
      %17 = sbr.rel (0) target = $region9
    $region8: #{forward.1} parent=1 // pred_region
      %19 = vsyncadd [#allocation3], 0
      %s20 = sshll.u32 %s1, 4
      %s21 = int_to_ptr.hbm [resolvable:$true] %s20
      %s22 = sshll.u32 [#allocation2], 4
      %s23 = int_to_ptr.vmem [resolvable:$true] %s22
      %28 = dma.hbm_to_vmem [thread:$0]  %s21, 1024, %s23, [#allocation3], 64, 64, 4
    $region9: #{forward.1} parent=1 // pred_fallthru
      _
    // Predicated region
    $region10: #{forward.1} parent=1 // pred_check
      _
    $region11: #{forward.1} parent=1 // pred_check_branch
      %30 = sbr.rel (0) target = $region13
    $region12: #{forward.1} parent=1 // pred_region
      _
    $region13: #{forward.1} parent=1 // pred_fallthru
      _
    // Predicated region
    $region14: #{forward.1} parent=1 // pred_check
      _
    $region15: #{forward.1} parent=1 // pred_check_branch
      %32 = sbr.rel (0) target = $region17
    $region16: #{forward.1} parent=1 // pred_region
      %34 = vsyncadd [#allocation5], 0
      %s35 = sshll.u32 %s3, 4
      %s36 = int_to_ptr.hbm [resolvable:$true] %s35
      %s37 = sshll.u32 [#allocation4], 4
      %s38 = int_to_ptr.vmem [resolvable:$true] %s37
      %43 = dma.hbm_to_vmem [thread:$0]  %s36, 1024, %s38, [#allocation5], 64, 64, 4
    $region17: #{forward.1} parent=1 // pred_fallthru
      _
    // Predicated region
    $region18: #{forward.1} parent=1 // pred_check
      _
    $region19: #{forward.1} parent=1 // pred_check_branch
      %45 = sbr.rel (0) target = $region21
    $region20: #{forward.1} parent=1 // pred_region
      _
    $region21: #{forward.1} parent=1 // pred_fallthru
      _
    // Predicated region
    $region22: #{forward.1} parent=1 // pred_check
      _
    $region23: #{forward.1} parent=1 // pred_check_branch
      %47 = sbr.rel (0) target = $region25
    $region24: #{forward.1} parent=1 // pred_region
      %49 = vsyncadd [#allocation5], 0
      %s50 = sshll.u32 %s5, 4
      %s51 = int_to_ptr.hbm [resolvable:$true] %s50
      %s52 = sshll.u32 [#allocation6], 4
      %s53 = int_to_ptr.vmem [resolvable:$true] %s52
      %58 = dma.hbm_to_vmem [thread:$0]  %s51, 1024, %s53, [#allocation5], 64, 64, 4
    $region25: #{forward.1} parent=1 // pred_fallthru
      _
    // Predicated region
    $region26: #{forward.1} parent=1 // pred_check
      _
    $region27: #{forward.1} parent=1 // pred_check_branch
      %60 = sbr.rel (0) target = $region29
    $region28: #{forward.1} parent=1 // pred_region
      _
    $region29: #{forward.1} parent=1 // pred_fallthru
      _
    // Predicated region
    $region30: #{forward.1} parent=1 // pred_check
      _
    $region31: #{forward.1} parent=1 // pred_check_branch
      %62 = sbr.rel (0) target = $region33
    $region32: #{forward.1} parent=1 // pred_region
      %64 = dma.done [#allocation3], 1024
    $region33: #{forward.1} parent=1 // pred_fallthru
      _
    // Predicated region
    $region34: #{forward.1} parent=1 // pred_check
      _
    $region35: #{forward.1} parent=1 // pred_check_branch
      %66 = sbr.rel (0) target = $region37
    $region36: #{forward.1} parent=1 // pred_region
      %68 = dma.done [#allocation5], 1024
    $region37: #{forward.1} parent=1 // pred_fallthru
      _
    // Predicated region
    $region38: #{forward.1} parent=1 // pred_check
      _
    $region39: #{forward.1} parent=1 // pred_check_branch
      %70 = sbr.rel (0) target = $region41
    $region40: #{forward.1} parent=1 // pred_region
      %72 = dma.done [#allocation5], 1024
    $region41: #{forward.1} parent=1 // pred_fallthru
      _
    %v73 = vld [vmem:[%s0] sm:$0xf]
    %v74 = vld [vmem:[%s0 + $0x4] sm:$0xf]
    %v75 = vld [vmem:[#allocation2] sm:$0xf]
    %v76 = vld [vmem:[#allocation2 + $0x4] sm:$0xf]
    %v77 = vld [vmem:[#allocation2 + $0x8] sm:$0xf]
    %v78 = vld [vmem:[#allocation2 + $0xc] sm:$0xf]
    %v79 = vld [vmem:[#allocation2 + $0x10] sm:$0xf]
    %v80 = vld [vmem:[#allocation2 + $0x14] sm:$0xf]
    %v81 = vld [vmem:[#allocation2 + $0x18] sm:$0xf]
    %v82 = vld [vmem:[#allocation2 + $0x1c] sm:$0xf]
    %v83 = vld [vmem:[#allocation2 + $0x20] sm:$0xf]
    %v84 = vld [vmem:[#allocation2 + $0x24] sm:$0xf]
    %v85 = vld [vmem:[#allocation2 + $0x28] sm:$0xf]
    %v86 = vld [vmem:[#allocation2 + $0x2c] sm:$0xf]
    %v87 = vld [vmem:[#allocation2 + $0x30] sm:$0xf]
    %v88 = vld [vmem:[#allocation2 + $0x34] sm:$0xf]
    %v89 = vld [vmem:[#allocation2 + $0x38] sm:$0xf]
    %v90 = vld [vmem:[#allocation2 + $0x3c] sm:$0xf]
    %v91 = vld [vmem:[%s2] sm:$0x1]
    %v93 = vperm.slane %v91, 0
    %v97 = vunpack.c.l.b16 %v73
    %v98 = vunpack.c.l.b16 %v74
    %v99 = vpack.c.b16 %v98, %v97
    %v117 = vunpack.c.l.b16 %v75
    %v118 = vunpack.c.l.b16 %v76
    %v119 = vunpack.c.l.b16 %v77
    %v120 = vunpack.c.l.b16 %v78
    %v121 = vunpack.c.l.b16 %v79
    %v122 = vunpack.c.l.b16 %v80
    %v123 = vunpack.c.l.b16 %v81
    %v124 = vunpack.c.l.b16 %v82
    %v125 = vunpack.c.l.b16 %v83
    %v126 = vunpack.c.l.b16 %v84
    %v127 = vunpack.c.l.b16 %v85
    %v128 = vunpack.c.l.b16 %v86
    %v129 = vunpack.c.l.b16 %v87
    %v130 = vunpack.c.l.b16 %v88
    %v131 = vunpack.c.l.b16 %v89
    %v132 = vunpack.c.l.b16 %v90
    %v133 = vpack.c.b16 %v118, %v117
    %v134 = vpack.c.b16 %v120, %v119
    %v135 = vpack.c.b16 %v122, %v121
    %v136 = vpack.c.b16 %v124, %v123
    %v137 = vpack.c.b16 %v126, %v125
    %v138 = vpack.c.b16 %v128, %v127
    %v139 = vpack.c.b16 %v130, %v129
    %v140 = vpack.c.b16 %v132, %v131
    %149 = vmatpush.bf16.msra.mxu0 %v140
    %150 = vmatpush.bf16.msra.mxu0 %v139
    %151 = vmatpush.bf16.msra.mxu0 %v138
    %152 = vmatpush.bf16.msra.mxu0 %v137
    %153 = vmatpush.bf16.msra.mxu0 %v136
    %154 = vmatpush.bf16.msra.mxu0 %v135
    %155 = vmatpush.bf16.msra.mxu0 %v134
    %156 = vmatpush.bf16.msra.mxu0 %v133
    %157 = vmatmul.bf16.gmra.mxu0 %v99
    %v158 = vpop.f32.mrf.mxu0
    %v159 = vadd.f32 %v93, %v158
    %v160 = vpop.f32.mrf.mxu0
    %v161 = vadd.f32 %v93, %v160
    %162 = vdwg.mxu0
    %v163 = vmax.f32 %v159, 0.0
    %v164 = vmax.f32 %v161, 0.0
    %v165 = vpack.c.bf16 %v164, %v163
    %v166 = vld [vmem:[#allocation6] sm:$0xf]
    %v167 = vld [vmem:[#allocation6 + $0x4] sm:$0xf]
    %v168 = vld [vmem:[#allocation6 + $0x8] sm:$0xf]
    %v169 = vld [vmem:[#allocation6 + $0xc] sm:$0xf]
    %v170 = vld [vmem:[#allocation6 + $0x10] sm:$0xf]
    %v171 = vld [vmem:[#allocation6 + $0x14] sm:$0xf]
    %v172 = vld [vmem:[#allocation6 + $0x18] sm:$0xf]
    %v173 = vld [vmem:[#allocation6 + $0x1c] sm:$0xf]
    %v174 = vld [vmem:[#allocation6 + $0x20] sm:$0xf]
    %v175 = vld [vmem:[#allocation6 + $0x24] sm:$0xf]
    %v176 = vld [vmem:[#allocation6 + $0x28] sm:$0xf]
    %v177 = vld [vmem:[#allocation6 + $0x2c] sm:$0xf]
    %v178 = vld [vmem:[#allocation6 + $0x30] sm:$0xf]
    %v179 = vld [vmem:[#allocation6 + $0x34] sm:$0xf]
    %v180 = vld [vmem:[#allocation6 + $0x38] sm:$0xf]
    %v181 = vld [vmem:[#allocation6 + $0x3c] sm:$0xf]
    %v182 = vld [vmem:[%s6] sm:$0x1]
    %v184 = vperm.slane %v182, 0
    %v202 = vunpack.c.l.b16 %v166
    %v203 = vunpack.c.l.b16 %v167
    %v204 = vunpack.c.l.b16 %v168
    %v205 = vunpack.c.l.b16 %v169
    %v206 = vunpack.c.l.b16 %v170
    %v207 = vunpack.c.l.b16 %v171
    %v208 = vunpack.c.l.b16 %v172
    %v209 = vunpack.c.l.b16 %v173
    %v210 = vunpack.c.l.b16 %v174
    %v211 = vunpack.c.l.b16 %v175
    %v212 = vunpack.c.l.b16 %v176
    %v213 = vunpack.c.l.b16 %v177
    %v214 = vunpack.c.l.b16 %v178
    %v215 = vunpack.c.l.b16 %v179
    %v216 = vunpack.c.l.b16 %v180
    %v217 = vunpack.c.l.b16 %v181
    %v218 = vpack.c.b16 %v203, %v202
    %v219 = vpack.c.b16 %v205, %v204
    %v220 = vpack.c.b16 %v207, %v206
    %v221 = vpack.c.b16 %v209, %v208
    %v222 = vpack.c.b16 %v211, %v210
    %v223 = vpack.c.b16 %v213, %v212
    %v224 = vpack.c.b16 %v215, %v214
    %v225 = vpack.c.b16 %v217, %v216
    %234 = vmatpush.bf16.msra.mxu0 %v225
    %235 = vmatpush.bf16.msra.mxu0 %v224
    %236 = vmatpush.bf16.msra.mxu0 %v223
    %237 = vmatpush.bf16.msra.mxu0 %v222
    %238 = vmatpush.bf16.msra.mxu0 %v221
    %239 = vmatpush.bf16.msra.mxu0 %v220
    %240 = vmatpush.bf16.msra.mxu0 %v219
    %241 = vmatpush.bf16.msra.mxu0 %v218
    %242 = vmatmul.bf16.gmra.mxu0 %v165
    %v243 = vpop.f32.mrf.mxu0
    %v244 = vadd.f32 %v184, %v243
    %v245 = vpop.f32.mrf.mxu0
    %v246 = vadd.f32 %v184, %v245
    %247 = vdwg.mxu0
    %v248 = vpack.c.bf16 %v244, %v244
    %v249 = vpack.c.bf16 %v246, %v246
    %250 = vst [vmem:[%s7] sm:$0xf] %v248
    %251 = vst [vmem:[%s7 + $0x4] sm:$0xf] %v249
    // Predicated region
    $region42: #{forward.1} parent=1 // pred_check
      _
    $region43: #{forward.1} parent=1 // pred_check_branch
      %253 = sbr.rel (0) target = $region45
    $region44: #{forward.1} parent=1 // pred_region
      _
    $region45: #{forward.1} parent=1 // pred_fallthru
      _
    // Predicated region
    $region46: #{forward.1} parent=1 // pred_check
      _
    $region47: #{forward.1} parent=1 // pred_check_branch
      %255 = sbr.rel (0) target = $region49
    $region48: #{forward.1} parent=1 // pred_region
      _
    $region49: #{forward.1} parent=1 // pred_fallthru
      _
    %256 = vsyncpa [#allocation3], 1
    %257 = vsyncpa [#allocation5], 1

</llo_original>
